<compile_context>
chip_gen: v7x
topology: tpu7x:2x2x1
jax: 0.10.0
libtpu: 0.0.40
codegen_flags: <defaults>
</compile_context>

<pallas_src>
import math

import jax
import jax.numpy as jnp
from jax.experimental import pallas as pl
from jax.experimental.pallas import tpu as pltpu


def _resolve_size(size, numel):
    """Resolve a torch-style size tuple that may contain a single -1."""
    if isinstance(size, int):
        size = (size,)
    size = tuple(int(s) for s in size)
    if -1 in size:
        known = 1
        for s in size:
            if s != -1:
                known *= s
        assert known > 0 and numel % known == 0, "cannot infer -1 dimension"
        size = tuple(numel // known if s == -1 else s for s in size)
    assert math.prod(size) == numel, "view size incompatible with numel"
    return size


def _dma_copy_kernel(x_hbm, o_hbm, sem):
    # Single DMA-engine HBM->HBM copy. No VMEM staging, no vld/vst, no grid
    # steps: the DMA engine streams the whole (contiguous) array at the copy
    # roofline on every TPU generation.
    cp = pltpu.make_async_copy(x_hbm, o_hbm, sem)
    cp.start()
    cp.wait()


def view_pallas(tensor, size):
    """Pallas implementation of View(size).forward(tensor) (materializing copy)."""
    numel = math.prod(tensor.shape)
    out_size = _resolve_size(size, numel)

    # Degenerate cases where a DMA copy is pointless / ill-formed: empty
    # tensors and rank-0 targets. The reshape IS the full .view semantics.
    if numel == 0 or len(out_size) == 0:
        return jnp.reshape(tensor, out_size)

    # Present the data in the target shape *before* the copy so the kernel's
    # output already carries the requested shape (any layout change the target
    # shape implies is paid exactly once, here, and never re-applied to the
    # copied result).
    x = jnp.reshape(tensor, out_size)

    itemsize = jnp.dtype(tensor.dtype).itemsize
    return pl.pallas_call(
        _dma_copy_kernel,
        out_shape=jax.ShapeDtypeStruct(out_size, tensor.dtype),
        in_specs=[pl.BlockSpec(memory_space=pl.ANY)],
        out_specs=pl.BlockSpec(memory_space=pl.ANY),
        scratch_shapes=[pltpu.SemaphoreType.DMA(())],
        # Pure memory traffic: read + write of numel elements.
        cost_estimate=pl.CostEstimate(
            flops=0, transcendentals=0, bytes_accessed=2 * numel * itemsize),
    )(x)


class View:
    """Mirror of the PyTorch nn.Module (no parameters)."""

    def __init__(self, size, *, copy=True):
        self.size = size
        self.copy = copy  # copy=False → pure metadata reshape (true .view)

    def __call__(self, tensor):
        if not self.copy:
            return jnp.reshape(
                tensor, _resolve_size(self.size, math.prod(tensor.shape)))
        return view_pallas(tensor, self.size)


if __name__ == "__main__":
    key = jax.random.PRNGKey(0)

    # 1) Typical vanilla_vae usage: NCHW decoder activations → View((-1, CHW)).
    B, C, H, W = 2, 4, 16, 16
    x = jax.random.normal(key, (B, C, H, W), dtype=jnp.float32)
    module = View((-1, C * H * W))
    out = jax.block_until_ready(module(x))
    ref = jnp.reshape(x, (B, C * H * W))
    assert out.shape == ref.shape, out.shape
    assert out.dtype == x.dtype
    assert bool(jnp.all(out == ref))

    # 2) A different target rank / awkward trailing dims (64-wide last dim):
    #    the DMA copy is shape-agnostic, no tiling constraints to satisfy.
    x2 = jax.random.normal(jax.random.PRNGKey(1), (2, 16, 32, 32), jnp.float32)
    out2 = jax.block_until_ready(view_pallas(x2, (-1, 16, 64)))
    ref2 = jnp.reshape(x2, (-1, 16, 64))
    assert out2.shape == ref2.shape, out2.shape
    assert bool(jnp.all(out2 == ref2))

    # 3) bfloat16 and a flat 1-D target.
    x3 = jax.random.normal(jax.random.PRNGKey(2), (2, 8, 32), jnp.bfloat16)
    out3 = jax.block_until_ready(view_pallas(x3, (-1,)))
    ref3 = jnp.reshape(x3, (-1,))
    assert out3.shape == ref3.shape and out3.dtype == x3.dtype
    assert bool(jnp.all(out3 == ref3))

    # 4) Zero-copy path (the faithful .view semantics, no kernel).
    out4 = jax.block_until_ready(View((-1, C * H * W), copy=False)(x))
    assert bool(jnp.all(out4 == ref))

    print("KERNEL_OK")
</pallas_src>

<mosaic_0001>
module attributes {stable_mosaic.version = 11 : i64} {
  func.func @_dma_copy_kernel(%arg0: memref<2x1024xf32, #tpu.memory_space<any>>, %arg1: memref<2x1024xf32, #tpu.memory_space<any>>, %arg2: memref<!tpu.dma_semaphore, #tpu.memory_space<semaphore_mem>>) attributes {dimension_semantics = [], scalar_prefetch = 0 : i64, scratch_operands = 1 : i64, tpu.core_type = #tpu.core_type<tc>} {
    tpu.enqueue_dma source(%arg0 : memref<2x1024xf32, #tpu.memory_space<any>>) target(%arg1 : memref<2x1024xf32, #tpu.memory_space<any>>) target_semaphore(%arg2 : memref<!tpu.dma_semaphore, #tpu.memory_space<semaphore_mem>>)
    tpu.wait_dma2 semaphore(%arg2 : memref<!tpu.dma_semaphore, #tpu.memory_space<semaphore_mem>>) src(%arg0 : memref<2x1024xf32, #tpu.memory_space<any>>) dst(%arg1 : memref<2x1024xf32, #tpu.memory_space<any>>)
    return
  }
}

</mosaic_0001>

<llo_original>
// kernel: tpu_custom_call.1
$region0: #{tpu_custom_call.1}
  #allocation0 [shape = 'u32[]', space=smem, size = 0x4, offset = 0x4, fixed_abs, tag = 'smem constant byte address 0x4 - core index']
  #allocation1 [shape = 'u32[144,128]{1,0:T(1,128)}', space=vmem, size = 0x12000, scoped, tag = 'internal scratch']
  #allocation2 [shape = 's32[1]{0}', space=sflag, size = 0x4, scoped, tag = 'scratch operand']
  #allocation3 [shape = 's32[]', space=sflag, size = 0x4, offset = 0, fixed_abs, tag = 'sflag constant byte address 0x0 - dummy sync flag']
  #allocation4 [shape = 'u32[0]{0}', space=smem, size = 0, offset = 0, fixed_abs, tag = 'smem constant byte address 0x0 - null']
  %s0 = inlined_call_operand.hbm [shape: f32[2,1024], index: 0, kind: input, shape index: {}]
  %s1 = inlined_call_operand.hbm [shape: f32[2,1024], index: 1, kind: output, shape index: {}]
  %s2 = sld [smem:[#allocation0]]
  $region2: #{tpu_custom_call.1} parent=0
    _
  %s4 = ssub.s32 1, %s2
  %s5 = scalar_select 0, %s4, %s2
  %s7 = sshll.u32 1, 14
  %s8 = sxor.u32 4294967295, %s7
  %s11 = sshll.u32 3, 24
  %s12 = sxor.u32 4294967295, %s11
  %s13 = sand.u32 0, %s12
  %s15 = sor.u32 %s13, 0
  %18 = dma.general %s0, 256, %s1, [#allocation2], [#allocation3], [#allocation4], %s15, 0
  %s19 = smul.u32 2, 1
  %s20 = smul.u32 %s19, 8
  %s21 = sshll.u32 %s20, 4
  %22 = dma.done [#allocation2], %s21
  %23 = vsyncmov [#allocation2]
  %s24 = vpop.sfrf %23
  %p25 = scmp.eq.s32.totalorder %s24, 0
  %p26 = pneg %p25
  %28 = shalt.err (%p26)

</llo_original>
